<compile_context>
chip_gen: v7x
topology: tpu7x:2x2x1
jax: 0.10.0
libtpu: 0.0.40
codegen_flags: <defaults>
</compile_context>

<pallas_src>
import jax
import jax.numpy as jnp
from jax.experimental import pallas as pl
from jax.experimental.pallas import tpu as pltpu


_LANE = 128
_SUB = 8
_VMEM_BUDGET = 18 * 1024 * 1024   # target double-buffered working set (bytes)


def _round_up(v, m):
    return ((v + m - 1) // m) * m


# ----------------------------------------------------------------------------
# Shared fused math:
#   conv[p]   = w0*x[p-1] + w1*x[p] + w2*x[p+1]          (Conv1d, pad=1)
#   pooled[t] = max(relu(conv[2t]+b), relu(conv[2t+1]+b))
#             = relu(max(conv_even, conv_odd) + b)        (ReLU monotone)
# ----------------------------------------------------------------------------
def _fused_taps(xm1, x0, xp1, xp2, w0, w1, w2, b):
    conv_even = w0 * xm1 + w1 * x0 + w2 * xp1     # conv at position 2t
    conv_odd = w0 * x0 + w1 * xp1 + w2 * xp2      # conv at position 2t+1
    return jnp.maximum(jnp.maximum(conv_even, conv_odd) + b, 0.0)


def _conv_pool_kernel_ncl(xs_ref, w_ref, o_ref):
    """Direct PyTorch layout: o_ref (TN, C, TH) — C on sublanes, H on lanes.

    xs_ref: (TN, 4, TH)  packed tap streams [x[2t-1], x[2t], x[2t+1], x[2t+2]]
    w_ref : (C, 4)       packed [w0, w1, w2, bias]
    """
    wb = w_ref[...][None, :, :]                                     # (1, C, 4)
    o_ref[...] = _fused_taps(
        xs_ref[:, 0:1, :], xs_ref[:, 1:2, :],
        xs_ref[:, 2:3, :], xs_ref[:, 3:4, :],
        wb[:, :, 0:1], wb[:, :, 1:2], wb[:, :, 2:3], wb[:, :, 3:4])


def _conv_pool_kernel_nlc(xs_ref, w_ref, o_ref):
    """Small-H layout: o_ref (TN, H, C) — H on sublanes, C (lane-dense) on lanes.

    xs_ref: (TN, H, 4)   packed tap streams
    w_ref : (4, C)       packed [w0, w1, w2, bias]
    """
    wb = w_ref[...][None, :, :]                                     # (1, 4, C)
    o_ref[...] = _fused_taps(
        xs_ref[:, :, 0:1], xs_ref[:, :, 1:2],
        xs_ref[:, :, 2:3], xs_ref[:, :, 3:4],
        wb[:, 0:1, :], wb[:, 1:2, :], wb[:, 2:3, :], wb[:, 3:4, :])


# ----------------------------------------------------------------------------
# Tile sizing (padded VMEM footprint, double buffered).
# ----------------------------------------------------------------------------
def _ncl_tiles(n, c, h):
    """Tiles for the H >= 128 (direct NCL) path: returns (TN, TH)."""
    th = max(_LANE, min(h // _LANE, 16) * _LANE)        # multiple of 128
    c_pad = _round_up(c, _SUB)
    # Padded f32 bytes per batch row (out tile + packed input streams), x2 buf.
    per_tn = 2 * 4 * th * (c_pad + _SUB)
    tn = max(1, min(n, _VMEM_BUDGET // per_tn))
    # >= 2 grid steps so v7x can shard the parallel axes across both TCs.
    if pl.cdiv(n, tn) * pl.cdiv(h, th) < 2 and n >= 2:
        tn = pl.cdiv(n, 2)
    return tn, th


def _nlc_tiles(n, c, h):
    """Batch tile for the H < 128 (channels-on-lanes) path: returns TN."""
    h_pad = _round_up(h, _SUB)
    c_pad = _round_up(c, _LANE)
    per_tn = 2 * 4 * h_pad * (c_pad + _LANE)
    tn = max(1, min(n, _VMEM_BUDGET // per_tn))
    if pl.cdiv(n, tn) < 2 and n >= 2:
        tn = pl.cdiv(n, 2)
    return tn


# ----------------------------------------------------------------------------
# Wrapper
# ----------------------------------------------------------------------------
def cnn_model2_forward(x, weight, bias):
    """x: (N, 1, L) f32, weight: (C, 1, 3), bias: (C,) -> (N, C, L//2) f32."""
    N, cin, L = x.shape
    assert cin == 1 and L % 2 == 0
    C = weight.shape[0]
    H = L // 2

    x2d = x[:, 0, :].astype(jnp.float32)
    # Pre-shifted, fully aligned tap streams (length H each, boundary zeros
    # folded in):  xm1[t]=x[2t-1], x0[t]=x[2t], xp1[t]=x[2t+1], xp2[t]=x[2t+2].
    xp = jnp.pad(x2d, ((0, 0), (1, 1)))                  # x[-1] = x[L] = 0
    xm1 = xp[:, 0:L:2]
    x0 = xp[:, 1:L + 1:2]
    xp1 = xp[:, 2:L + 2:2]
    xp2 = xp[:, 3:L + 3:2]

    w = weight[:, 0, :].astype(jnp.float32)              # (C, 3)
    b = bias.astype(jnp.float32).reshape(C, 1)
    wpack = jnp.concatenate([w, b], axis=1)              # (C, 4): w0,w1,w2,bias

    if H >= _LANE:
        # Lane-dense direct NCL output; grid over batch and pooled positions.
        xs = jnp.stack([xm1, x0, xp1, xp2], axis=1)      # (N, 4, H)
        tn, th = _ncl_tiles(N, C, H)
        grid = (pl.cdiv(N, tn), pl.cdiv(H, th))
        return pl.pallas_call(
            _conv_pool_kernel_ncl,
            out_shape=jax.ShapeDtypeStruct((N, C, H), jnp.float32),
            grid=grid,
            in_specs=[
                pl.BlockSpec((tn, 4, th), lambda i, j: (i, 0, j)),   # taps
                pl.BlockSpec((C, 4), lambda i, j: (0, 0)),           # w+b
            ],
            out_specs=pl.BlockSpec((tn, C, th), lambda i, j: (i, 0, j)),
            compiler_params=pltpu.CompilerParams(
                dimension_semantics=("parallel", "parallel"),
                vmem_limit_bytes=32 * 1024 * 1024,
            ),
        )(xs, wpack)

    # Small H: keep channels on the (dense) lane axis inside the kernel and do
    # the cheap small-output NHC -> NCH layout fixup in the wrapper.
    xs = jnp.stack([xm1, x0, xp1, xp2], axis=2)          # (N, H, 4)
    tn = _nlc_tiles(N, C, H)
    grid = (pl.cdiv(N, tn),)
    out_nhc = pl.pallas_call(
        _conv_pool_kernel_nlc,
        out_shape=jax.ShapeDtypeStruct((N, H, C), jnp.float32),
        grid=grid,
        in_specs=[
            pl.BlockSpec((tn, H, 4), lambda i: (i, 0, 0)),           # taps
            pl.BlockSpec((4, C), lambda i: (0, 0)),                  # w+b
        ],
        out_specs=pl.BlockSpec((tn, H, C), lambda i: (i, 0, 0)),
        compiler_params=pltpu.CompilerParams(
            dimension_semantics=("parallel",),
            vmem_limit_bytes=32 * 1024 * 1024,
        ),
    )(xs, wpack.T)
    return jnp.transpose(out_nhc, (0, 2, 1))             # (N, C, H)


# ----------------------------------------------------------------------------
# Pure-JAX reference (PyTorch Conv1d / ReLU / MaxPool1d semantics)
# ----------------------------------------------------------------------------
def reference_forward(x, weight, bias):
    N, _, L = x.shape
    C = weight.shape[0]
    x2d = x[:, 0, :]
    x_pad = jnp.pad(x2d, ((0, 0), (1, 1)))
    conv = (x_pad[:, None, 0:L] * weight[None, :, 0, 0:1]
            + x_pad[:, None, 1:L + 1] * weight[None, :, 0, 1:2]
            + x_pad[:, None, 2:L + 2] * weight[None, :, 0, 2:3]
            + bias[None, :, None])                        # (N, C, L)
    conv = jnp.maximum(conv, 0.0)
    return jnp.max(conv.reshape(N, C, L // 2, 2), axis=-1)


if __name__ == "__main__":
    key = jax.random.PRNGKey(0)
    k_x1, k_x2, k_w, k_b = jax.random.split(key, 4)

    C = 100
    weight = jax.random.normal(k_w, (C, 1, 3), dtype=jnp.float32) * 0.5
    bias = jax.random.normal(k_b, (C,), dtype=jnp.float32) * 0.1

    # Path 1: small H (H = 8 < 128) -> channels-on-lanes kernel + NHC->NCH fixup.
    N1, L1 = 2, 16
    x1 = jax.random.normal(k_x1, (N1, 1, L1), dtype=jnp.float32)
    out1 = jax.block_until_ready(cnn_model2_forward(x1, weight, bias))
    ref1 = reference_forward(x1, weight, bias)
    assert out1.shape == (N1, C, L1 // 2), out1.shape
    assert jnp.allclose(out1, ref1, atol=1e-5, rtol=1e-5), "mismatch (small-H path)"

    # Path 2: H = 128 -> lane-dense direct NCL output, grid over (N, H) tiles.
    N2, L2 = 2, 256
    x2 = jax.random.normal(k_x2, (N2, 1, L2), dtype=jnp.float32)
    out2 = jax.block_until_ready(cnn_model2_forward(x2, weight, bias))
    ref2 = reference_forward(x2, weight, bias)
    assert out2.shape == (N2, C, L2 // 2), out2.shape
    assert jnp.allclose(out2, ref2, atol=1e-5, rtol=1e-5), "mismatch (NCL path)"

    print("KERNEL_OK")
</pallas_src>

<mosaic_0001>
module attributes {stable_mosaic.version = 11 : i64} {
  func.func @_conv_pool_kernel_nlc(%arg0: i32, %arg1: memref<1x8x4xf32, #tpu.memory_space<vmem>>, %arg2: memref<4x100xf32, #tpu.memory_space<vmem>>, %arg3: memref<1x8x100xf32, #tpu.memory_space<vmem>>) attributes {dimension_semantics = [#tpu.dimension_semantics<parallel>], iteration_bounds = array<i64: 2>, scalar_prefetch = 0 : i64, scratch_operands = 0 : i64, tpu.core_type = #tpu.core_type<tc>, window_params = [{transform_indices = @transform_0, window_bounds = array<i64: 1, 8, 4>}, {pipeline_mode = #tpu.pipeline_mode<synchronous>, transform_indices = @transform_1, window_bounds = array<i64: 4, 100>}, {transform_indices = @transform_2, window_bounds = array<i64: 1, 8, 100>}]} {
    %c0 = arith.constant 0 : index
    %c0_0 = arith.constant 0 : index
    %0 = vector.load %arg2[%c0, %c0_0] : memref<4x100xf32, #tpu.memory_space<vmem>>, vector<4x100xf32>
    %1 = vector.shape_cast %0 : vector<4x100xf32> to vector<1x4x100xf32>
    %c0_1 = arith.constant 0 : index
    %c0_2 = arith.constant 0 : index
    %c0_3 = arith.constant 0 : index
    %2 = vector.load %arg1[%c0_1, %c0_2, %c0_3] : memref<1x8x4xf32, #tpu.memory_space<vmem>>, vector<1x8x1xf32>
    %c0_4 = arith.constant 0 : index
    %c0_5 = arith.constant 0 : index
    %c1 = arith.constant 1 : index
    %3 = vector.load %arg1[%c0_4, %c0_5, %c1] : memref<1x8x4xf32, #tpu.memory_space<vmem>>, vector<1x8x1xf32>
    %c0_6 = arith.constant 0 : index
    %c0_7 = arith.constant 0 : index
    %c2 = arith.constant 2 : index
    %4 = vector.load %arg1[%c0_6, %c0_7, %c2] : memref<1x8x4xf32, #tpu.memory_space<vmem>>, vector<1x8x1xf32>
    %c0_8 = arith.constant 0 : index
    %c0_9 = arith.constant 0 : index
    %c3 = arith.constant 3 : index
    %5 = vector.load %arg1[%c0_8, %c0_9, %c3] : memref<1x8x4xf32, #tpu.memory_space<vmem>>, vector<1x8x1xf32>
    %6 = vector.extract_strided_slice %1 {offsets = [0, 0, 0], sizes = [1, 1, 100], strides = [1, 1, 1]} : vector<1x4x100xf32> to vector<1x1x100xf32>
    %7 = vector.extract_strided_slice %1 {offsets = [0, 1, 0], sizes = [1, 1, 100], strides = [1, 1, 1]} : vector<1x4x100xf32> to vector<1x1x100xf32>
    %8 = vector.extract_strided_slice %1 {offsets = [0, 2, 0], sizes = [1, 1, 100], strides = [1, 1, 1]} : vector<1x4x100xf32> to vector<1x1x100xf32>
    %9 = vector.extract_strided_slice %1 {offsets = [0, 3, 0], sizes = [1, 1, 100], strides = [1, 1, 1]} : vector<1x4x100xf32> to vector<1x1x100xf32>
    %10 = vector.broadcast %6 : vector<1x1x100xf32> to vector<1x8x100xf32>
    %11 = vector.broadcast %2 : vector<1x8x1xf32> to vector<1x8x100xf32>
    %12 = arith.mulf %10, %11 : vector<1x8x100xf32>
    %13 = vector.broadcast %7 : vector<1x1x100xf32> to vector<1x8x100xf32>
    %14 = vector.broadcast %3 : vector<1x8x1xf32> to vector<1x8x100xf32>
    %15 = arith.mulf %13, %14 : vector<1x8x100xf32>
    %16 = arith.addf %12, %15 : vector<1x8x100xf32>
    %17 = vector.broadcast %8 : vector<1x1x100xf32> to vector<1x8x100xf32>
    %18 = vector.broadcast %4 : vector<1x8x1xf32> to vector<1x8x100xf32>
    %19 = arith.mulf %17, %18 : vector<1x8x100xf32>
    %20 = arith.addf %16, %19 : vector<1x8x100xf32>
    %21 = vector.broadcast %6 : vector<1x1x100xf32> to vector<1x8x100xf32>
    %22 = vector.broadcast %3 : vector<1x8x1xf32> to vector<1x8x100xf32>
    %23 = arith.mulf %21, %22 : vector<1x8x100xf32>
    %24 = vector.broadcast %7 : vector<1x1x100xf32> to vector<1x8x100xf32>
    %25 = vector.broadcast %4 : vector<1x8x1xf32> to vector<1x8x100xf32>
    %26 = arith.mulf %24, %25 : vector<1x8x100xf32>
    %27 = arith.addf %23, %26 : vector<1x8x100xf32>
    %28 = vector.broadcast %8 : vector<1x1x100xf32> to vector<1x8x100xf32>
    %29 = vector.broadcast %5 : vector<1x8x1xf32> to vector<1x8x100xf32>
    %30 = arith.mulf %28, %29 : vector<1x8x100xf32>
    %31 = arith.addf %27, %30 : vector<1x8x100xf32>
    %32 = arith.maximumf %20, %31 : vector<1x8x100xf32>
    %33 = vector.broadcast %9 : vector<1x1x100xf32> to vector<1x8x100xf32>
    %34 = arith.addf %32, %33 : vector<1x8x100xf32>
    %cst = arith.constant 0.000000e+00 : f32
    %35 = vector.broadcast %cst : f32 to vector<1x8x100xf32>
    %36 = arith.maximumf %34, %35 : vector<1x8x100xf32>
    %c0_10 = arith.constant 0 : index
    %c0_11 = arith.constant 0 : index
    %c0_12 = arith.constant 0 : index
    %37 = vector.load %arg3[%c0_10, %c0_11, %c0_12] : memref<1x8x100xf32, #tpu.memory_space<vmem>>, vector<1x8x100xf32>
    tpu.vector_store %arg3[%c0_10, %c0_11, %c0_12], %36 {strides = array<i32>} : memref<1x8x100xf32, #tpu.memory_space<vmem>>, vector<1x8x100xf32>,
    return
  }
  func.func @transform_0(%arg0: i32) -> (i32, i32, i32) {
    %c0_i32 = arith.constant 0 : i32
    %c0_i32_0 = arith.constant 0 : i32
    %c0_i32_1 = arith.constant 0 : i32
    return %arg0, %c0_i32, %c0_i32_0 : i32, i32, i32
  }
  func.func @transform_1(%arg0: i32) -> (i32, i32) {
    %c0_i32 = arith.constant 0 : i32
    %c0_i32_0 = arith.constant 0 : i32
    %c0_i32_1 = arith.constant 0 : i32
    return %c0_i32, %c0_i32_0 : i32, i32
  }
  func.func @transform_2(%arg0: i32) -> (i32, i32, i32) {
    %c0_i32 = arith.constant 0 : i32
    %c0_i32_0 = arith.constant 0 : i32
    %c0_i32_1 = arith.constant 0 : i32
    return %arg0, %c0_i32, %c0_i32_0 : i32, i32, i32
  }
}

</mosaic_0001>

<llo_original>
// kernel: tpu_custom_call.1
$region0: #{tpu_custom_call.1}
  #allocation0 [shape = 'u32[]', space=smem, size = 0x4, offset = 0x4, fixed_abs, tag = 'smem constant byte address 0x4 - core index']
  #allocation1 [shape = 'u32[144,128]{1,0:T(1,128)}', space=vmem, size = 0x12000, scoped, tag = 'internal scratch']
  %s0 = inlined_call_operand.vmem [shape: f32[2,8,4], index: 0, kind: input, shape index: {}]
  %s1 = inlined_call_operand.vmem [shape: f32[4,100], index: 1, kind: input, shape index: {}]
  %s2 = inlined_call_operand.hbm [shape: f32[2,8,100], index: 2, kind: output, shape index: {}]
  %s3 = sld [smem:[#allocation0]]
  $region41: #{tpu_custom_call.1} parent=0
    _
  %s5 = ssub.s32 1, %s3
  %s6 = scalar_select 0, %s5, %s3
  $region1: #{tpu_custom_call.1} parent=0
    #allocation2 [shape = 'u8[8192]{0}', space=vmem, size = 0x2000, scoped, tag = 'output window, operand 0']
    #allocation3 [shape = 's32[2]{0}', space=sflag, size = 0x8, scoped, tag = 'scoped memory for tpu_custom_call.1']
    %7 = vsyncpa [#allocation3], 0
    %s8 = scalar_lea.sflag [#allocation3], 1
    %9 = vsyncpa %s8, 0
    loop: start=0, step=1, limit=4
    $region2: #{tpu_custom_call.1} parent=1 // loop_pre_header
      _
    $region3: #{tpu_custom_call.1} parent=1 // loop_header
      %s11 = sphi 0, %s15
      %p12 = scmp.ge.s32.totalorder %s11, 4
      %s21 = sphi 0, %s23
      %s24 = sphi 0, %s21
      %s25 = sphi 0, %s24
      %s41 = sphi 0, %s25
      %s45 = sphi 0, %s45
      %s47 = sphi 0, %s45
      %s48 = sphi 0, %s47
      %s62 = sphi 0, %s48
      %s68 = sphi 0, %s70
      %s71 = sphi 0, %s68
      %s72 = sphi 0, %s71
      %s88 = sphi 0, %s72
    $region4: #{tpu_custom_call.1} parent=1 // loop_header_branch
      %14 = sbr.rel (%p12) target = $region8
    $region5: #{tpu_custom_call.1} parent=1 // loop_body
      %s16 = ssub.s32 %s11, 1
      %s17 = ssub.s32 %s11, 2
      %s18 = sadd.s32 %s11, 1
      %s19 = ssub.s32 %s11, %s18
      %p20 = scmp.eq.s32.totalorder %s19, 0
      %s22 = sadd.s32 %s21, 1
      %s23 = scalar_select %p20, %s21, %s22
      %p26 = pneg %p20
      %p27 = scmp.eq.s32.totalorder %s11, 1
      %p28 = por %p26, %p27
      %p29 = scmp.ne.s32.totalorder %s21, %s24
      %p30 = scmp.eq.s32.totalorder %s11, 0
      %p31 = por %p29, %p30
      %p32 = scmp.ne.s32.totalorder %s21, %s24
      %p33 = scmp.eq.s32.totalorder %s16, 1
      %p34 = por %p32, %p33
      %p35 = scmp.ne.s32.totalorder %s24, %s25
      %p36 = scmp.eq.s32.totalorder %s16, 0
      %p37 = por %p35, %p36
      %p38 = scmp.ne.s32.totalorder %s24, %s25
      %p39 = scmp.eq.s32.totalorder %s17, 1
      %p40 = por %p38, %p39
      %p42 = scmp.ne.s32.totalorder %s25, %s41
      %p43 = scmp.eq.s32.totalorder %s17, 0
      %p44 = por %p42, %p43
      %s46 = sadd.s32 %s45, 1
      %p49 = scmp.eq.s32.totalorder %s11, 1
      %p50 = scmp.ne.s32.totalorder %s45, %s47
      %p51 = scmp.eq.s32.totalorder %s11, 0
      %p52 = por %p50, %p51
      %p53 = scmp.ne.s32.totalorder %s45, %s47
      %p54 = scmp.eq.s32.totalorder %s16, 1
      %p55 = por %p53, %p54
      %p56 = scmp.ne.s32.totalorder %s47, %s48
      %p57 = scmp.eq.s32.totalorder %s16, 0
      %p58 = por %p56, %p57
      %p59 = scmp.ne.s32.totalorder %s47, %s48
      %p60 = scmp.eq.s32.totalorder %s17, 1
      %p61 = por %p59, %p60
      %p63 = scmp.ne.s32.totalorder %s48, %s62
      %p64 = scmp.eq.s32.totalorder %s17, 0
      %p65 = por %p63, %p64
      %s66 = ssub.s32 %s11, %s18
      %p67 = scmp.eq.s32.totalorder %s66, 0
      %s69 = sadd.s32 %s68, 1
      %s70 = scalar_select %p67, %s68, %s69
      %p73 = pneg %p67
      %p74 = scmp.eq.s32.totalorder %s11, 1
      %p75 = por %p73, %p74
      %p76 = scmp.ne.s32.totalorder %s68, %s71
      %p77 = scmp.eq.s32.totalorder %s11, 0
      %p78 = por %p76, %p77
      %p79 = scmp.ne.s32.totalorder %s68, %s71
      %p80 = scmp.eq.s32.totalorder %s16, 1
      %p81 = por %p79, %p80
      %p82 = scmp.ne.s32.totalorder %s71, %s72
      %p83 = scmp.eq.s32.totalorder %s16, 0
      %p84 = por %p82, %p83
      %p85 = scmp.ne.s32.totalorder %s71, %s72
      %p86 = scmp.eq.s32.totalorder %s17, 1
      %p87 = por %p85, %p86
      %p89 = scmp.ne.s32.totalorder %s72, %s88
      %p90 = scmp.eq.s32.totalorder %s17, 0
      %p91 = por %p89, %p90
      %p92 = scmp.le.s32.totalorder 1, %s11
      %p93 = scmp.lt.s32.totalorder %s11, 3
      %p94 = pnand %p92, %p93
      %p95 = pneg %p94
      // Predicated region
      $region9: #{tpu_custom_call.1} parent=5 // pred_check
        _
      $region10: #{tpu_custom_call.1} parent=5 // pred_check_branch
        %97 = sbr.rel (%p94) target = $region12
      $region11: #{tpu_custom_call.1} parent=5 // pred_region
        %s98 = ssub.s32 %s11, 1
        // Predicated region
        $region13: #{tpu_custom_call.1} parent=11 // pred_check
          %p99 = pneg %p58
        $region14: #{tpu_custom_call.1} parent=11 // pred_check_branch
          %101 = sbr.rel (%p99) target = $region16
        $region15: #{tpu_custom_call.1} parent=11 // pred_region
          _
        $region16: #{tpu_custom_call.1} parent=11 // pred_fallthru
          _
      $region12: #{tpu_custom_call.1} parent=5 // pred_fallthru
        _
      %p102 = scmp.lt.s32.totalorder %s11, 2
      // Predicated region
      $region17: #{tpu_custom_call.1} parent=5 // pred_check
        %p103 = pneg %p102
      $region18: #{tpu_custom_call.1} parent=5 // pred_check_branch
        %105 = sbr.rel (%p103) target = $region20
      $region19: #{tpu_custom_call.1} parent=5 // pred_region
        // Predicated region
        $region21: #{tpu_custom_call.1} parent=19 // pred_check
          %p106 = pneg %p31
        $region22: #{tpu_custom_call.1} parent=19 // pred_check_branch
          %108 = sbr.rel (%p106) target = $region24
        $region23: #{tpu_custom_call.1} parent=19 // pred_region
          %p109 = scmp.lt.s32.totalorder %s11, 1
          %s110 = scalar_select %p109, %s11, 1
          %s111 = smul.addr %s110, 8
          %s112 = scalar_lea.vmem %s0, %s111
        $region24: #{tpu_custom_call.1} parent=19 // pred_fallthru
          _
      $region20: #{tpu_custom_call.1} parent=5 // pred_fallthru
        _
      %p113 = scmp.le.s32.totalorder 1, %s11
      %p114 = scmp.lt.s32.totalorder %s11, 3
      %p115 = pnand %p113, %p114
      %p116 = pneg %p115
      // Predicated region
      $region25: #{tpu_custom_call.1} parent=5 // pred_check
        _
      $region26: #{tpu_custom_call.1} parent=5 // pred_check_branch
        %118 = sbr.rel (%p115) target = $region28
      $region27: #{tpu_custom_call.1} parent=5 // pred_region
        %s119 = ssub.s32 %s11, 1
        %p120 = scmp.lt.s32.totalorder %s16, 1
        %s121 = scalar_select %p120, %s16, 1
        %s122 = smul.addr %s121, 8
        %s123 = scalar_lea.vmem %s0, %s122
        %p124 = pneg %p37
        %p125 = pneg %p34
        %p126 = pneg %p58
        %p127 = pneg %p55
        %p128 = pneg %p84
        %p129 = pneg %p81
        %s130 = sand.u32 %s71, 1
        %s131 = scalar_lea.sflag [#allocation3], %s130
        %s132 = sand.u32 %s71, 1
        %s133 = smul.addr %s132, 8
        %s134 = scalar_lea.vmem [#allocation2], %s133
        %p135 = scmp.lt.s32.totalorder %s16, 1
        %s136 = scalar_select %p135, %s16, 1
        %s137 = smul.addr %s136, 8
        %s138 = scalar_lea.vmem %s0, %s137
        %v139 = vld [vmem:[%s1] sm:$0xf]
        %v140 = vld [vmem:[%s138] sm:$0xff]
        %v141 = vlaneseq
        %v142 = vshrl.u32 %v141, 7
        %v143 = vsub.s32 0, %v142
        %v144 = vrot.slane %v139, %v143
        %146 = vset.pattern.permute.xlu0 0
        %147 = vperm.xlu0 %146, %v140
        %v148 = vpop.permute.xlu0 %147
        %v150 = vmul.f32 %v144, %v148
        %v151 = vlaneseq
        %v152 = vshrl.u32 %v151, 7
        %v153 = vsub.s32 1, %v152
        %v154 = vrot.slane %v139, %v153
        %155 = vset.pattern.permute.xlu0 1
        %156 = vperm.xlu0 %155, %v140
        %v157 = vpop.permute.xlu0 %156
        %v159 = vmul.f32 %v154, %v157
        %v160 = vadd.f32 %v150, %v159
        %v161 = vlaneseq
        %v162 = vshrl.u32 %v161, 7
        %v163 = vsub.s32 2, %v162
        %v164 = vrot.slane %v139, %v163
        %165 = vset.pattern.permute.xlu0 2
        %166 = vperm.xlu0 %165, %v140
        %v167 = vpop.permute.xlu0 %166
        %v169 = vmul.f32 %v164, %v167
        %v170 = vadd.f32 %v160, %v169
        %v171 = vmul.f32 %v144, %v157
        %v172 = vmul.f32 %v154, %v167
        %v173 = vadd.f32 %v171, %v172
        %174 = vset.pattern.permute.xlu0 3
        %175 = vperm.xlu0 %174, %v140
        %v176 = vpop.permute.xlu0 %175
        %v178 = vmul.f32 %v164, %v176
        %v179 = vadd.f32 %v173, %v178
        %v180 = vmax.f32 %v170, %v179
        %v181 = vlaneseq
        %v182 = vshrl.u32 %v181, 7
        %v183 = vsub.s32 3, %v182
        %v184 = vrot.slane %v139, %v183
        %v185 = vadd.f32 %v180, %v184
        %v186 = vmax.f32 %v185, 0.0
        %vm187 = vcmask 818176
        %188 = vst.msk [vmem:[%s134] sm:$0xff] %vm187, %v186
        %s189 = sand.u32 %s71, 1
        %s190 = scalar_lea.sflag [#allocation3], %s189
        %s191 = sand.u32 %s71, 1
        %s192 = smul.addr %s191, 8
        %s193 = scalar_lea.vmem [#allocation2], %s192
        // Predicated region
        $region29: #{tpu_custom_call.1} parent=27 // pred_check
          %p194 = pneg %p81
        $region30: #{tpu_custom_call.1} parent=27 // pred_check_branch
          %196 = sbr.rel (%p194) target = $region32
        $region31: #{tpu_custom_call.1} parent=27 // pred_region
          %s198 = ssub.s32 128, 128
          %199 = vsyncadd %s190, %s198
          %s200 = smul.addr %s16, 128
          %s201 = scalar_lea.hbm %s2, %s200
          %s203 = sshll.u32 %s193, 4
          %s204 = int_to_ptr.vmem [resolvable:$true] %s203
          %206 = dma.vmem_to_hbm [thread:$0]  %s204, 128, %s201, %s190
        $region32: #{tpu_custom_call.1} parent=27 // pred_fallthru
          _
      $region28: #{tpu_custom_call.1} parent=5 // pred_fallthru
        _
      %p207 = scmp.le.s32.totalorder 2, %s11
      // Predicated region
      $region33: #{tpu_custom_call.1} parent=5 // pred_check
        %p208 = pneg %p207
      $region34: #{tpu_custom_call.1} parent=5 // pred_check_branch
        %210 = sbr.rel (%p208) target = $region36
      $region35: #{tpu_custom_call.1} parent=5 // pred_region
        %s211 = ssub.s32 %s11, 2
        // Predicated region
        $region37: #{tpu_custom_call.1} parent=35 // pred_check
          %p212 = pneg %p87
        $region38: #{tpu_custom_call.1} parent=35 // pred_check_branch
          %214 = sbr.rel (%p212) target = $region40
        $region39: #{tpu_custom_call.1} parent=35 // pred_region
          %s215 = sand.u32 %s72, 1
          %s216 = scalar_lea.sflag [#allocation3], %s215
          %s217 = sand.u32 %s72, 1
          %s218 = smul.addr %s217, 8
          %s219 = scalar_lea.vmem [#allocation2], %s218
          %220 = dma.done %s216, 128
        $region40: #{tpu_custom_call.1} parent=35 // pred_fallthru
          _
      $region36: #{tpu_custom_call.1} parent=5 // pred_fallthru
        _
    $region6: #{tpu_custom_call.1} parent=1 // loop_footer
      %s15 = sadd.s32 1, %s11
    $region7: #{tpu_custom_call.1} parent=1 // loop_footer_branch
      %10 = sbr.rel target = $region3
    $region8: #{tpu_custom_call.1} parent=1 // loop_exit
      _
    %221 = vsyncpa [#allocation3], 1
    %s222 = scalar_lea.sflag [#allocation3], 1
    %223 = vsyncpa %s222, 1

</llo_original>
